<compile_context>
chip_gen: v7x
topology: tpu7x:2x2x1
jax: 0.10.0
libtpu: 0.0.40
codegen_flags: <defaults>
</compile_context>

<pallas_src>
import jax
import jax.numpy as jnp
from jax.experimental import pallas as pl
from jax.experimental.pallas import tpu as pltpu


def _proposal_kernel(x_ref, a_ref, b_ref, o_ref):
    """Fused transform chain: out = tanh(x) * a + b  (affine-to-bounds)."""
    x = x_ref[...]                                  # (tile_r, tile_l)
    y = jnp.tanh(x) * a_ref[...] + b_ref[...]       # a/b broadcast over rows
    o_ref[...] = y.astype(o_ref.dtype)


def _widen_lanes(n, td, lane_cap=4096):
    """Largest sample-group g (divisor of n) so L = g*td <= lane_cap.

    Prefers g with L a multiple of 128 (fully unmasked lane-dense stores).
    """
    best_g = 1
    best_aligned_g = None
    for g in range(1, n + 1):
        if n % g:
            continue
        L = g * td
        if L > lane_cap:
            break
        best_g = g
        if L % 128 == 0:
            best_aligned_g = g
    return best_aligned_g if best_aligned_g is not None else best_g


def _choose_tiles(rows, ncols, itembytes=4, target_bytes=4 << 20):
    """Pick (tile_r, tile_l) so one tile is ~<= target_bytes.

    With 1 in + 1 out stream, double-buffered, 4x tile_bytes (~16 MiB) fits
    under the 40 MiB vmem_limit_bytes we request (physical VMEM is 64-128 MiB).
    Block shapes stay (8,128)-legal: either full-dim or 8/128-aligned.
    """
    row_bytes = ncols * itembytes
    if row_bytes <= target_bytes:
        tile_l = ncols                               # full lane dim (legal)
        tile_r = max(1, target_bytes // row_bytes)
        if tile_r >= rows:
            tile_r = rows                            # full dim: always legal
        else:
            tile_r = max(8, (tile_r // 8) * 8)       # 8-aligned sublanes
    else:
        # Huge rows: split the lane dim too (2nd grid axis), 128-aligned.
        tile_r = rows if rows < 8 else 8
        lanes = max(1, target_bytes // (tile_r * itembytes))
        tile_l = max(128, (lanes // 128) * 128)
        if tile_l >= ncols:
            tile_l = ncols
    return tile_r, tile_l


def proposal_forward(param, lo, hi, *, compute_dtype=jnp.float32,
                     force_pallas=False, min_pallas_elems=64 * 1024):
    """Proposal.forward() with the fused (tanh -> affine-to-bounds) chain.

    param: (n_samples, T, D) learnable parameter tensor
    lo/hi: (D,) action bounds, broadcast over samples and time.
    """
    n, t, d = param.shape
    td = t * d
    total = n * td

    # Tiny workloads: a pallas_call launch (+pipeline prologue) costs more than
    # the work itself; let XLA fuse tanh+affine instead.
    if total < min_pallas_elems and not force_pallas:
        s = jnp.tanh(param.astype(compute_dtype))
        a = (0.5 * (hi - lo)).astype(compute_dtype)
        b = (0.5 * (hi + lo)).astype(compute_dtype)
        return (s * a + b).astype(jnp.float32)

    # Lane-dense layout: group g whole samples per row -> (rows, L) with L wide.
    g = _widen_lanes(n, td)
    rows, L = n // g, g * td
    itembytes = jnp.dtype(compute_dtype).itemsize

    x = param.astype(compute_dtype).reshape(rows, L)
    a = jnp.tile((0.5 * (hi - lo)).astype(compute_dtype), t * g).reshape(1, L)
    b = jnp.tile((0.5 * (hi + lo)).astype(compute_dtype), t * g).reshape(1, L)

    tile_r, tile_l = _choose_tiles(rows, L, itembytes)
    grid = (pl.cdiv(rows, tile_r), pl.cdiv(L, tile_l))

    cost = pl.CostEstimate(
        flops=2 * total,                 # one FMA per element
        transcendentals=total,           # one tanh per element
        bytes_accessed=2 * total * itembytes + 2 * L * itembytes,
    )

    out = pl.pallas_call(
        _proposal_kernel,
        out_shape=jax.ShapeDtypeStruct((rows, L), jnp.float32),
        grid=grid,
        in_specs=[
            pl.BlockSpec((tile_r, tile_l), lambda i, j: (i, j)),
            pl.BlockSpec((1, tile_l), lambda i, j: (0, j)),   # a (broadcast)
            pl.BlockSpec((1, tile_l), lambda i, j: (0, j)),   # b (broadcast)
        ],
        out_specs=pl.BlockSpec((tile_r, tile_l), lambda i, j: (i, j)),
        compiler_params=pltpu.CompilerParams(
            dimension_semantics=("parallel", "parallel"),
            vmem_limit_bytes=40 << 20,
        ),
        cost_estimate=cost,
    )(x, a, b)
    return out.reshape(n, t, d)


def reference_forward(param, lo, hi):
    s = jnp.tanh(param)
    return lo.reshape(1, 1, -1) + 0.5 * (s + 1.0) * (hi - lo).reshape(1, 1, -1)


if __name__ == "__main__":
    key = jax.random.PRNGKey(0)
    k_param, _ = jax.random.split(key)

    # Module config: shape = (T, D) = (8, 32), n_samples = 2, bias=0.0, scale=1.0
    n_samples, T, D = 2, 8, 32
    bias, scale = 0.0, 1.0

    # Deterministic parameter init ~ Normal(bias, scale), as in __init__.
    param = bias + scale * jax.random.normal(
        k_param, (n_samples, T, D), dtype=jnp.float32)

    # Action bounds for the affine transform.
    lo = jnp.full((D,), -2.0, dtype=jnp.float32)
    hi = jnp.full((D,), 2.0, dtype=jnp.float32)

    # force_pallas=True: the demo problem is tiny, but we want to exercise and
    # verify the Pallas kernel path itself.
    out = proposal_forward(param, lo, hi, force_pallas=True)
    out = jax.block_until_ready(out)

    ref = reference_forward(param, lo, hi)
    assert out.shape == (n_samples, T, D)
    assert out.dtype == jnp.float32
    assert jnp.allclose(out, ref, atol=1e-5, rtol=1e-5)

    print("KERNEL_OK")
</pallas_src>

<mosaic_0001>
module attributes {stable_mosaic.version = 11 : i64} {
  func.func @_proposal_kernel(%arg0: i32, %arg1: i32, %arg2: memref<1x512xf32, #tpu.memory_space<vmem>>, %arg3: memref<1x512xf32, #tpu.memory_space<vmem>>, %arg4: memref<1x512xf32, #tpu.memory_space<vmem>>, %arg5: memref<1x512xf32, #tpu.memory_space<vmem>>) attributes {dimension_semantics = [#tpu.dimension_semantics<parallel>, #tpu.dimension_semantics<parallel>], iteration_bounds = array<i64: 1, 1>, scalar_prefetch = 0 : i64, scratch_operands = 0 : i64, tpu.core_type = #tpu.core_type<tc>, window_params = [{transform_indices = @transform_0, window_bounds = array<i64: 1, 512>}, {transform_indices = @transform_1, window_bounds = array<i64: 1, 512>}, {transform_indices = @transform_2, window_bounds = array<i64: 1, 512>}, {transform_indices = @transform_3, window_bounds = array<i64: 1, 512>}]} {
    %c0 = arith.constant 0 : index
    %c0_0 = arith.constant 0 : index
    %0 = vector.load %arg2[%c0, %c0_0] : memref<1x512xf32, #tpu.memory_space<vmem>>, vector<1x512xf32>
    %1 = math.tanh %0 : vector<1x512xf32>
    %c0_1 = arith.constant 0 : index
    %c0_2 = arith.constant 0 : index
    %2 = vector.load %arg3[%c0_1, %c0_2] : memref<1x512xf32, #tpu.memory_space<vmem>>, vector<1x512xf32>
    %3 = arith.mulf %1, %2 : vector<1x512xf32>
    %c0_3 = arith.constant 0 : index
    %c0_4 = arith.constant 0 : index
    %4 = vector.load %arg4[%c0_3, %c0_4] : memref<1x512xf32, #tpu.memory_space<vmem>>, vector<1x512xf32>
    %5 = arith.addf %3, %4 : vector<1x512xf32>
    %c0_5 = arith.constant 0 : index
    %c0_6 = arith.constant 0 : index
    %6 = vector.load %arg5[%c0_5, %c0_6] : memref<1x512xf32, #tpu.memory_space<vmem>>, vector<1x512xf32>
    tpu.vector_store %arg5[%c0_5, %c0_6], %5 {strides = array<i32>} : memref<1x512xf32, #tpu.memory_space<vmem>>, vector<1x512xf32>,
    return
  }
  func.func @transform_0(%arg0: i32, %arg1: i32) -> (i32, i32) {
    %c0_i32 = arith.constant 0 : i32
    return %arg0, %arg1 : i32, i32
  }
  func.func @transform_1(%arg0: i32, %arg1: i32) -> (i32, i32) {
    %c0_i32 = arith.constant 0 : i32
    %c0_i32_0 = arith.constant 0 : i32
    return %c0_i32, %arg1 : i32, i32
  }
  func.func @transform_2(%arg0: i32, %arg1: i32) -> (i32, i32) {
    %c0_i32 = arith.constant 0 : i32
    %c0_i32_0 = arith.constant 0 : i32
    return %c0_i32, %arg1 : i32, i32
  }
  func.func @transform_3(%arg0: i32, %arg1: i32) -> (i32, i32) {
    %c0_i32 = arith.constant 0 : i32
    return %arg0, %arg1 : i32, i32
  }
}

</mosaic_0001>

<llo_original>
// kernel: tpu_custom_call.1
$region0: #{tpu_custom_call.1}
  #allocation0 [shape = 'u32[]', space=smem, size = 0x4, offset = 0x4, fixed_abs, tag = 'smem constant byte address 0x4 - core index']
  #allocation1 [shape = 'u32[144,128]{1,0:T(1,128)}', space=vmem, size = 0x12000, scoped, tag = 'internal scratch']
  %s0 = inlined_call_operand.hbm [shape: f32[1,512], index: 0, kind: input, shape index: {}]
  %s1 = inlined_call_operand.hbm [shape: f32[1,512], index: 1, kind: input, shape index: {}]
  %s2 = inlined_call_operand.vmem [shape: f32[1,512], index: 2, kind: input, shape index: {}]
  %s3 = inlined_call_operand.hbm [shape: f32[1,512], index: 3, kind: output, shape index: {}]
  %s4 = sld [smem:[#allocation0]]
  $region30: #{tpu_custom_call.1} parent=0
    _
  %s6 = ssub.s32 1, %s4
  %s7 = scalar_select 0, %s6, %s4
  $region1: #{tpu_custom_call.1} parent=0
    #allocation2 [shape = 'u8[2048]{0}', space=vmem, size = 0x800, scoped, tag = 'input window, operand 0, single buffered']
    #allocation3 [shape = 's32[1]{0}', space=sflag, size = 0x4, scoped, tag = 'scoped memory for tpu_custom_call.1']
    #allocation4 [shape = 's32[1]{0}', space=sflag, size = 0x4, scoped, tag = 'scoped memory for tpu_custom_call.1']
    #allocation5 [shape = 'u8[2048]{0}', space=vmem, size = 0x800, scoped, tag = 'input window, operand 1, single buffered']
    #allocation6 [shape = 's32[1]{0}', space=sflag, size = 0x4, scoped, tag = 'scoped memory for tpu_custom_call.1']
    #allocation7 [shape = 'u8[2048]{0}', space=vmem, size = 0x800, scoped, tag = 'output window, operand 0, single buffered']
    %8 = vsyncpa [#allocation3], 0
    %9 = vsyncpa [#allocation6], 0
    %10 = vsyncpa [#allocation4], 0
    // Predicated region
    $region2: #{tpu_custom_call.1} parent=1 // pred_check
      _
    $region3: #{tpu_custom_call.1} parent=1 // pred_check_branch
      %12 = sbr.rel (0) target = $region5
    $region4: #{tpu_custom_call.1} parent=1 // pred_region
      %s14 = ssub.s32 64, 64
      %15 = vsyncadd [#allocation3], %s14
      %s17 = sshll.u32 [#allocation2], 4
      %s18 = int_to_ptr.vmem [resolvable:$true] %s17
      %20 = dma.hbm_to_vmem [thread:$0]  %s0, 64, %s18, [#allocation3]
    $region5: #{tpu_custom_call.1} parent=1 // pred_fallthru
      _
    // Predicated region
    $region6: #{tpu_custom_call.1} parent=1 // pred_check
      _
    $region7: #{tpu_custom_call.1} parent=1 // pred_check_branch
      %22 = sbr.rel (0) target = $region9
    $region8: #{tpu_custom_call.1} parent=1 // pred_region
      %s24 = ssub.s32 64, 64
      %25 = vsyncadd [#allocation6], %s24
      %s27 = sshll.u32 [#allocation5], 4
      %s28 = int_to_ptr.vmem [resolvable:$true] %s27
      %30 = dma.hbm_to_vmem [thread:$0]  %s1, 64, %s28, [#allocation6]
    $region9: #{tpu_custom_call.1} parent=1 // pred_fallthru
      _
    // Predicated region
    $region10: #{tpu_custom_call.1} parent=1 // pred_check
      _
    $region11: #{tpu_custom_call.1} parent=1 // pred_check_branch
      %32 = sbr.rel (0) target = $region13
    $region12: #{tpu_custom_call.1} parent=1 // pred_region
      _
    $region13: #{tpu_custom_call.1} parent=1 // pred_fallthru
      _
    // Predicated region
    $region14: #{tpu_custom_call.1} parent=1 // pred_check
      _
    $region15: #{tpu_custom_call.1} parent=1 // pred_check_branch
      %34 = sbr.rel (0) target = $region17
    $region16: #{tpu_custom_call.1} parent=1 // pred_region
      %35 = dma.done [#allocation3], 64
    $region17: #{tpu_custom_call.1} parent=1 // pred_fallthru
      _
    // Predicated region
    $region18: #{tpu_custom_call.1} parent=1 // pred_check
      _
    $region19: #{tpu_custom_call.1} parent=1 // pred_check_branch
      %37 = sbr.rel (0) target = $region21
    $region20: #{tpu_custom_call.1} parent=1 // pred_region
      %38 = dma.done [#allocation6], 64
    $region21: #{tpu_custom_call.1} parent=1 // pred_fallthru
      _
    %v39 = vld [vmem:[#allocation2] sm:$0xf]
    %v40 = vtanh.pop %v39
    %v41 = vld [vmem:[#allocation5] sm:$0xf]
    %v42 = vmul.f32 %v40, %v41
    %v43 = vld [vmem:[%s2] sm:$0xf]
    %v44 = vadd.f32 %v42, %v43
    %v45 = vlaneseq
    %vm46 = vcmp.ge.s32.totalorder %v45, 0
    %vm47 = vcmp.lt.s32.totalorder %v45, 512
    %vm48 = vmand %vm46, %vm47
    %49 = vst.msk [vmem:[#allocation7] sm:$0xf] %vm48, %v44
    // Predicated region
    $region22: #{tpu_custom_call.1} parent=1 // pred_check
      _
    $region23: #{tpu_custom_call.1} parent=1 // pred_check_branch
      %51 = sbr.rel (0) target = $region25
    $region24: #{tpu_custom_call.1} parent=1 // pred_region
      %s53 = ssub.s32 64, 64
      %54 = vsyncadd [#allocation4], %s53
      %s56 = sshll.u32 [#allocation7], 4
      %s57 = int_to_ptr.vmem [resolvable:$true] %s56
      %59 = dma.vmem_to_hbm [thread:$0]  %s57, 64, %s3, [#allocation4]
    $region25: #{tpu_custom_call.1} parent=1 // pred_fallthru
      _
    // Predicated region
    $region26: #{tpu_custom_call.1} parent=1 // pred_check
      _
    $region27: #{tpu_custom_call.1} parent=1 // pred_check_branch
      %61 = sbr.rel (0) target = $region29
    $region28: #{tpu_custom_call.1} parent=1 // pred_region
      %62 = dma.done [#allocation4], 64
    $region29: #{tpu_custom_call.1} parent=1 // pred_fallthru
      _
    %63 = vsyncpa [#allocation3], 1
    %64 = vsyncpa [#allocation6], 1
    %65 = vsyncpa [#allocation4], 1

</llo_original>
